<compile_context>
chip_gen: v7x
topology: tpu7x:2x2x1
jax: 0.10.0
libtpu: 0.0.40
codegen_flags: <defaults>
</compile_context>

<pallas_src>
import functools

import jax
import jax.numpy as jnp
from jax.experimental import pallas as pl
from jax.experimental.pallas import tpu as pltpu


_FAST_PATH_MAX_E = 4096   # below this, a single fused XLA op beats a kernel
_MIN_BLOCKS = 4           # >= 2 * num_cores so v7x's 2 TCs both get work


def _gaussian_smearing_kernel(dist_ref, out_ref, *, coeff, start, step,
                              num_gaussians):
    # dist_ref: (1, TILE_E) f32    out_ref: (G, TILE_E) out_dtype
    d = dist_ref[...]                                            # (1, TILE_E)
    g = jax.lax.broadcasted_iota(jnp.int32, (num_gaussians, 1), 0)
    offset = start + step * g.astype(jnp.float32)                # (G, 1)
    diff = d - offset                                            # (G, TILE_E)
    # f32 math everywhere (v5e has no bf16 VPU/EUP); cast only at the store.
    out_ref[...] = jnp.exp(coeff * diff * diff).astype(out_ref.dtype)


def gaussian_smearing(dist, *, start=0.0, stop=5.0, num_gaussians=50,
                      tile_e=32768, out_dtype=jnp.float32, layout="EG"):
    """Pallas implementation of GaussianSmearing.forward.

    dist: any-shaped float array (flattened like torch's view(-1, 1)).
    layout:
      "EG" (default): returns (E, num_gaussians), exactly the torch layout.
        NOTE: this adds a full-array transpose after the kernel (~3x total HBM
        traffic for this memory-bound op).
      "GE": returns (num_gaussians, E) — the kernel's native lane-dense layout,
        no transpose.  Prefer this when the consumer (typically a Linear over
        the Gaussian axis) can take the transposed contraction layout.
    out_dtype: output dtype; bf16 halves the dominant HBM write stream.
    """
    assert num_gaussians >= 2, "need >= 2 Gaussians (torch ref indexes offset[1])"
    assert layout in ("EG", "GE"), layout

    # "Parameter" setup from Python scalars only (matches torch.linspace math).
    step = (float(stop) - float(start)) / (num_gaussians - 1)
    coeff = -0.5 / step ** 2

    dist_row = dist.reshape(1, -1).astype(jnp.float32)           # (1, E)
    e = dist_row.shape[1]

    # Small-E fast path: one fused XLA elementwise op beats kernel launch +
    # one grid step (+ transpose) for tiny inputs.
    if e <= _FAST_PATH_MAX_E:
        offset = start + step * jnp.arange(num_gaussians, dtype=jnp.float32)
        if layout == "GE":
            diff = dist_row - offset.reshape(-1, 1)              # (G, E)
        else:
            diff = dist_row.reshape(-1, 1) - offset.reshape(1, -1)  # (E, G)
        return jnp.exp(coeff * diff * diff).astype(out_dtype)

    # Tile size: multiple of 128 lanes, as large as VMEM comfortably allows,
    # but clamped so the grid keeps >= _MIN_BLOCKS blocks (v7x megacore) and
    # never exceeds E rounded up to a lane multiple.
    tile_e = max(128, (int(tile_e) // 128) * 128)
    e_rounded = ((e + 127) // 128) * 128
    per_block = ((-(-e // _MIN_BLOCKS) + 127) // 128) * 128
    tile_e = max(128, min(tile_e, per_block, e_rounded))
    grid = (pl.cdiv(e, tile_e),)

    out_t = pl.pallas_call(
        functools.partial(_gaussian_smearing_kernel, coeff=coeff,
                          start=float(start), step=step,
                          num_gaussians=num_gaussians),
        out_shape=jax.ShapeDtypeStruct((num_gaussians, e), out_dtype),
        grid_spec=pltpu.PrefetchScalarGridSpec(
            num_scalar_prefetch=0,
            grid=grid,
            in_specs=[pl.BlockSpec((1, tile_e), lambda i: (0, i))],
            out_specs=pl.BlockSpec((num_gaussians, tile_e), lambda i: (0, i)),
        ),
        compiler_params=pltpu.CompilerParams(
            dimension_semantics=("parallel",),
            vmem_limit_bytes=32 * 1024 * 1024),
    )(dist_row)

    if layout == "GE":
        return out_t
    # Torch drop-in layout (E, G). Costs an extra HBM read+write pass; use
    # layout="GE" when the consumer can take the transposed layout directly.
    # TODO(synk): fuse the downstream Linear over the Gaussian axis into this
    # kernel (MXU matmul on the (G, tile_e) tile) to avoid both the transpose
    # and a second HBM round-trip.
    return out_t.T


def _reference(dist, start=0.0, stop=5.0, num_gaussians=50):
    step = (stop - start) / (num_gaussians - 1)
    coeff = -0.5 / step ** 2
    offset = start + step * jnp.arange(num_gaussians, dtype=jnp.float32)
    d = dist.reshape(-1, 1) - offset.reshape(1, -1)
    return jnp.exp(coeff * d * d)


if __name__ == "__main__":
    key = jax.random.PRNGKey(0)
    k1, k2 = jax.random.split(key)

    # Case 1: E = 200 distances (small molecular graph) -> fused fast path,
    # torch (E, G) layout.
    dist1 = jax.random.uniform(k1, (200,), dtype=jnp.float32,
                               minval=0.0, maxval=5.0)
    out1 = jax.block_until_ready(gaussian_smearing(dist1))
    ref1 = _reference(dist1)
    assert out1.shape == (200, 50), out1.shape
    assert jnp.allclose(out1, ref1, atol=1e-5, rtol=1e-5), \
        float(jnp.max(jnp.abs(out1 - ref1)))

    # Case 2: larger 2-D dist (flattened like torch view(-1, 1)) -> Pallas
    # path with a multi-block grid and a partial last block.  Check both the
    # torch (E, G) layout and the transpose-free (G, E) layout.
    dist2 = jax.random.uniform(k2, (3, 3000), dtype=jnp.float32,
                               minval=0.0, maxval=5.0)
    ref2 = _reference(dist2)                                     # (9000, 50)
    out2 = jax.block_until_ready(gaussian_smearing(dist2))
    out2_ge = jax.block_until_ready(gaussian_smearing(dist2, layout="GE"))
    assert out2.shape == (9000, 50), out2.shape
    assert out2_ge.shape == (50, 9000), out2_ge.shape
    assert jnp.allclose(out2, ref2, atol=1e-5, rtol=1e-5), \
        float(jnp.max(jnp.abs(out2 - ref2)))
    assert jnp.allclose(out2_ge, ref2.T, atol=1e-5, rtol=1e-5), \
        float(jnp.max(jnp.abs(out2_ge - ref2.T)))

    # Case 3: bf16 output path (halves the dominant HBM write stream).
    out3 = jax.block_until_ready(
        gaussian_smearing(dist2, layout="GE", out_dtype=jnp.bfloat16))
    assert out3.dtype == jnp.bfloat16
    assert jnp.allclose(out3.astype(jnp.float32), ref2.T,
                        atol=1e-2, rtol=1e-2), \
        float(jnp.max(jnp.abs(out3.astype(jnp.float32) - ref2.T)))

    print("KERNEL_OK")
</pallas_src>

<mosaic_0001>
module attributes {stable_mosaic.version = 11 : i64} {
  func.func @_gaussian_smearing_kernel(%arg0: i32, %arg1: memref<1x2304xf32, #tpu.memory_space<vmem>>, %arg2: memref<50x2304xf32, #tpu.memory_space<vmem>>) attributes {dimension_semantics = [#tpu.dimension_semantics<parallel>], iteration_bounds = array<i64: 4>, scalar_prefetch = 0 : i64, scratch_operands = 0 : i64, tpu.core_type = #tpu.core_type<tc>, window_params = [{transform_indices = @transform_0, window_bounds = array<i64: 1, 2304>}, {transform_indices = @transform_1, window_bounds = array<i64: 50, 2304>}]} {
    %c0 = arith.constant 0 : index
    %c0_0 = arith.constant 0 : index
    %0 = vector.load %arg1[%c0, %c0_0] : memref<1x2304xf32, #tpu.memory_space<vmem>>, vector<1x2304xf32>
    %1 = tpu.iota {dimensions = array<i32: 0>} : vector<50x1xi32>
    %2 = arith.sitofp %1 : vector<50x1xi32> to vector<50x1xf32>
    %cst = arith.constant 0.10204082 : f32
    %3 = vector.broadcast %cst : f32 to vector<50x1xf32>
    %4 = arith.mulf %3, %2 : vector<50x1xf32>
    %cst_1 = arith.constant 0.000000e+00 : f32
    %5 = vector.broadcast %cst_1 : f32 to vector<50x1xf32>
    %6 = arith.addf %5, %4 : vector<50x1xf32>
    %7 = vector.broadcast %0 : vector<1x2304xf32> to vector<50x2304xf32>
    %8 = vector.broadcast %6 : vector<50x1xf32> to vector<50x2304xf32>
    %9 = arith.subf %7, %8 : vector<50x2304xf32>
    %cst_2 = arith.constant -4.802000e+01 : f32
    %10 = vector.broadcast %cst_2 : f32 to vector<50x2304xf32>
    %11 = arith.mulf %10, %9 : vector<50x2304xf32>
    %12 = arith.mulf %11, %9 : vector<50x2304xf32>
    %13 = math.exp %12 : vector<50x2304xf32>
    %c0_3 = arith.constant 0 : index
    %c0_4 = arith.constant 0 : index
    %14 = vector.load %arg2[%c0_3, %c0_4] : memref<50x2304xf32, #tpu.memory_space<vmem>>, vector<50x2304xf32>
    tpu.vector_store %arg2[%c0_3, %c0_4], %13 {strides = array<i32>} : memref<50x2304xf32, #tpu.memory_space<vmem>>, vector<50x2304xf32>,
    return
  }
  func.func @transform_0(%arg0: i32) -> (i32, i32) {
    %c0_i32 = arith.constant 0 : i32
    %c0_i32_0 = arith.constant 0 : i32
    return %c0_i32, %arg0 : i32, i32
  }
  func.func @transform_1(%arg0: i32) -> (i32, i32) {
    %c0_i32 = arith.constant 0 : i32
    %c0_i32_0 = arith.constant 0 : i32
    return %c0_i32, %arg0 : i32, i32
  }
}

</mosaic_0001>

<llo_original>
// kernel: tpu_custom_call.1
$region0: #{tpu_custom_call.1}
  #allocation0 [shape = 'u32[]', space=smem, size = 0x4, offset = 0x4, fixed_abs, tag = 'smem constant byte address 0x4 - core index']
  #allocation1 [shape = 'u32[144,128]{1,0:T(1,128)}', space=vmem, size = 0x12000, scoped, tag = 'internal scratch']
  %s0 = inlined_call_operand.hbm [shape: f32[1,9000], index: 0, kind: input, shape index: {}]
  %s1 = inlined_call_operand.hbm [shape: f32[50,9000], index: 1, kind: output, shape index: {}]
  %s2 = sld [smem:[#allocation0]]
  $region41: #{tpu_custom_call.1} parent=0
    _
  %s4 = ssub.s32 1, %s2
  %s5 = scalar_select 0, %s4, %s2
  $region1: #{tpu_custom_call.1} parent=0
    #allocation2 [shape = 'u8[18432]{0}', space=vmem, size = 0x4800, scoped, tag = 'input window, operand 0']
    #allocation3 [shape = 's32[2]{0}', space=sflag, size = 0x8, scoped, tag = 'scoped memory for tpu_custom_call.1']
    #allocation4 [shape = 's32[2]{0}', space=sflag, size = 0x8, scoped, tag = 'scoped memory for tpu_custom_call.1']
    #allocation5 [shape = 'u8[1032192]{0}', space=vmem, size = 0xfc000, scoped, tag = 'output window, operand 0']
    %6 = vsyncpa [#allocation3], 0
    %s7 = scalar_lea.sflag [#allocation3], 1
    %8 = vsyncpa %s7, 0
    %9 = vsyncpa [#allocation4], 0
    %s10 = scalar_lea.sflag [#allocation4], 1
    %11 = vsyncpa %s10, 0
    loop: start=0, step=1, limit=6
    $region2: #{tpu_custom_call.1} parent=1 // loop_pre_header
      _
    $region3: #{tpu_custom_call.1} parent=1 // loop_header
      %s13 = sphi 0, %s17
      %p14 = scmp.ge.s32.totalorder %s13, 6
      %s23 = sphi 0, %s25
      %s26 = sphi 0, %s23
      %s27 = sphi 0, %s26
      %s43 = sphi 0, %s27
      %s49 = sphi 0, %s51
      %s52 = sphi 0, %s49
      %s53 = sphi 0, %s52
      %s69 = sphi 0, %s53
    $region4: #{tpu_custom_call.1} parent=1 // loop_header_branch
      %16 = sbr.rel (%p14) target = $region8
    $region5: #{tpu_custom_call.1} parent=1 // loop_body
      %s18 = ssub.s32 %s13, 1
      %s19 = ssub.s32 %s13, 2
      %s20 = sadd.s32 %s13, 1
      %s21 = ssub.s32 %s13, %s20
      %p22 = scmp.eq.s32.totalorder %s21, 0
      %s24 = sadd.s32 %s23, 1
      %s25 = scalar_select %p22, %s23, %s24
      %p28 = pneg %p22
      %p29 = scmp.eq.s32.totalorder %s13, 3
      %p30 = por %p28, %p29
      %p31 = scmp.ne.s32.totalorder %s23, %s26
      %p32 = scmp.eq.s32.totalorder %s13, 0
      %p33 = por %p31, %p32
      %p34 = scmp.ne.s32.totalorder %s23, %s26
      %p35 = scmp.eq.s32.totalorder %s18, 3
      %p36 = por %p34, %p35
      %p37 = scmp.ne.s32.totalorder %s26, %s27
      %p38 = scmp.eq.s32.totalorder %s18, 0
      %p39 = por %p37, %p38
      %p40 = scmp.ne.s32.totalorder %s26, %s27
      %p41 = scmp.eq.s32.totalorder %s19, 3
      %p42 = por %p40, %p41
      %p44 = scmp.ne.s32.totalorder %s27, %s43
      %p45 = scmp.eq.s32.totalorder %s19, 0
      %p46 = por %p44, %p45
      %s47 = ssub.s32 %s13, %s20
      %p48 = scmp.eq.s32.totalorder %s47, 0
      %s50 = sadd.s32 %s49, 1
      %s51 = scalar_select %p48, %s49, %s50
      %p54 = pneg %p48
      %p55 = scmp.eq.s32.totalorder %s13, 3
      %p56 = por %p54, %p55
      %p57 = scmp.ne.s32.totalorder %s49, %s52
      %p58 = scmp.eq.s32.totalorder %s13, 0
      %p59 = por %p57, %p58
      %p60 = scmp.ne.s32.totalorder %s49, %s52
      %p61 = scmp.eq.s32.totalorder %s18, 3
      %p62 = por %p60, %p61
      %p63 = scmp.ne.s32.totalorder %s52, %s53
      %p64 = scmp.eq.s32.totalorder %s18, 0
      %p65 = por %p63, %p64
      %p66 = scmp.ne.s32.totalorder %s52, %s53
      %p67 = scmp.eq.s32.totalorder %s19, 3
      %p68 = por %p66, %p67
      %p70 = scmp.ne.s32.totalorder %s53, %s69
      %p71 = scmp.eq.s32.totalorder %s19, 0
      %p72 = por %p70, %p71
      %p73 = scmp.le.s32.totalorder 1, %s13
      %p74 = scmp.lt.s32.totalorder %s13, 5
      %p75 = pnand %p73, %p74
      %p76 = pneg %p75
      // Predicated region
      $region9: #{tpu_custom_call.1} parent=5 // pred_check
        _
      $region10: #{tpu_custom_call.1} parent=5 // pred_check_branch
        %78 = sbr.rel (%p75) target = $region12
      $region11: #{tpu_custom_call.1} parent=5 // pred_region
        %s79 = ssub.s32 %s13, 1
      $region12: #{tpu_custom_call.1} parent=5 // pred_fallthru
        _
      %p80 = scmp.lt.s32.totalorder %s13, 4
      // Predicated region
      $region13: #{tpu_custom_call.1} parent=5 // pred_check
        %p81 = pneg %p80
      $region14: #{tpu_custom_call.1} parent=5 // pred_check_branch
        %83 = sbr.rel (%p81) target = $region16
      $region15: #{tpu_custom_call.1} parent=5 // pred_region
        // Predicated region
        $region17: #{tpu_custom_call.1} parent=15 // pred_check
          %p84 = pneg %p33
        $region18: #{tpu_custom_call.1} parent=15 // pred_check_branch
          %86 = sbr.rel (%p84) target = $region20
        $region19: #{tpu_custom_call.1} parent=15 // pred_region
          %s87 = sand.u32 %s23, 1
          %s88 = scalar_lea.sflag [#allocation3], %s87
          %s89 = sand.u32 %s23, 1
          %s90 = smul.addr %s89, 18
          %s91 = scalar_lea.vmem [#allocation2], %s90
          %s92 = smul.u32 18, %s13
          %s93 = ssub.s32 71, %s92
          %p94 = scmp.lt.s32.totalorder %s93, 18
          %s95 = scalar_select %p94, %s93, 18
          %s96 = smul.u32 16, %s95
          %s98 = ssub.s32 288, %s96
          %99 = vsyncadd %s88, %s98
          %p100 = scmp.ne.s32.totalorder 0, %s96
          %s101 = smul.addr %s92, 16
          %s102 = scalar_lea.hbm %s0, %s101
          %s103 = sshll.u32 %s95, 4
          %s104 = sshll.u32 %s91, 4
          %s105 = int_to_ptr.vmem [resolvable:$true] %s104
          %107 = dma.hbm_to_vmem [thread:$0]  (%p100), %s102, %s103, %s105, %s88
        $region20: #{tpu_custom_call.1} parent=15 // pred_fallthru
          _
      $region16: #{tpu_custom_call.1} parent=5 // pred_fallthru
        _
      %p108 = scmp.le.s32.totalorder 1, %s13
      %p109 = scmp.lt.s32.totalorder %s13, 5
      %p110 = pnand %p108, %p109
      %p111 = pneg %p110
      // Predicated region
      $region21: #{tpu_custom_call.1} parent=5 // pred_check
        _
      $region22: #{tpu_custom_call.1} parent=5 // pred_check_branch
        %113 = sbr.rel (%p110) target = $region24
      $region23: #{tpu_custom_call.1} parent=5 // pred_region
        %s114 = ssub.s32 %s13, 1
        %s115 = sand.u32 %s26, 1
        %s116 = scalar_lea.sflag [#allocation3], %s115
        %s117 = sand.u32 %s26, 1
        %s118 = smul.addr %s117, 18
        %s119 = scalar_lea.vmem [#allocation2], %s118
        // Predicated region
        $region25: #{tpu_custom_call.1} parent=23 // pred_check
          %p120 = pneg %p39
        $region26: #{tpu_custom_call.1} parent=23 // pred_check_branch
          %122 = sbr.rel (%p120) target = $region28
        $region27: #{tpu_custom_call.1} parent=23 // pred_region
          %123 = dma.done %s116, 288
        $region28: #{tpu_custom_call.1} parent=23 // pred_fallthru
          _
        %s124 = sand.u32 %s26, 1
        %s125 = scalar_lea.sflag [#allocation3], %s124
        %s126 = sand.u32 %s26, 1
        %s127 = smul.addr %s126, 18
        %s128 = scalar_lea.vmem [#allocation2], %s127
        %p129 = pneg %p39
        %p130 = pneg %p36
        %p131 = pneg %p65
        %p132 = pneg %p62
        %s133 = sand.u32 %s52, 1
        %s134 = scalar_lea.sflag [#allocation4], %s133
        %s135 = sand.u32 %s52, 1
        %s136 = smul.addr %s135, 1008
        %s137 = scalar_lea.vmem [#allocation5], %s136
        %s138 = smul.u32 18, %s18
        %s139 = ssub.s32 71, %s138
        %p140 = scmp.lt.s32.totalorder %s139, 18
        %s141 = scalar_select %p140, %s139, 18
        %s142 = smul.u32 16, %s141
        %s143 = smul.u32 18, %s18
        %s144 = ssub.s32 71, %s143
        %p145 = scmp.lt.s32.totalorder %s144, 18
        %s146 = scalar_select %p145, %s144, 18
        %s147 = smul.u32 896, %s146
        %v148 = vld [vmem:[%s119] sm:$0xff]
        %v149 = vld [vmem:[%s119 + $0x8] sm:$0xff]
        %v150 = vld [vmem:[%s119 + $0x10] sm:$0x3]
        %v151 = vlaneseq
        %v152 = vshrl.u32 %v151, 7
        %v153 = vadd.s32 %v152, 8
        %v154 = vadd.s32 %v152, 16
        %v155 = vadd.s32 %v152, 24
        %v156 = vadd.s32 %v152, 32
        %v157 = vadd.s32 %v152, 40
        %v158 = vadd.s32 %v152, 48
        %v159 = vcvt.s32.f32 %v152
        %v160 = vcvt.s32.f32 %v153
        %v161 = vcvt.s32.f32 %v154
        %v162 = vcvt.s32.f32 %v155
        %v163 = vcvt.s32.f32 %v156
        %v164 = vcvt.s32.f32 %v157
        %v165 = vcvt.s32.f32 %v158
        %v166 = vmul.f32 %v159, 0.10204082
        %v167 = vmul.f32 %v160, 0.10204082
        %v168 = vmul.f32 %v161, 0.10204082
        %v169 = vmul.f32 %v162, 0.10204082
        %v170 = vmul.f32 %v163, 0.10204082
        %v171 = vmul.f32 %v164, 0.10204082
        %v172 = vmul.f32 %v165, 0.10204082
        %v173 = vadd.f32 %v166, 0.0
        %v174 = vadd.f32 %v167, 0.0
        %v175 = vadd.f32 %v168, 0.0
        %v176 = vadd.f32 %v169, 0.0
        %v177 = vadd.f32 %v170, 0.0
        %v178 = vadd.f32 %v171, 0.0
        %v179 = vadd.f32 %v172, 0.0
        %v183 = vlaneseq
        %v184 = vshrl.u32 %v183, 7
        %v185 = vsub.s32 0, %v184
        %v186 = vrot.slane %v148, %v185
        %v187 = vlaneseq
        %v188 = vshrl.u32 %v187, 7
        %v189 = vsub.s32 1, %v188
        %v190 = vrot.slane %v148, %v189
        %v191 = vlaneseq
        %v192 = vshrl.u32 %v191, 7
        %v193 = vsub.s32 2, %v192
        %v194 = vrot.slane %v148, %v193
        %v195 = vlaneseq
        %v196 = vshrl.u32 %v195, 7
        %v197 = vsub.s32 3, %v196
        %v198 = vrot.slane %v148, %v197
        %v199 = vlaneseq
        %v200 = vshrl.u32 %v199, 7
        %v201 = vsub.s32 4, %v200
        %v202 = vrot.slane %v148, %v201
        %v203 = vlaneseq
        %v204 = vshrl.u32 %v203, 7
        %v205 = vsub.s32 5, %v204
        %v206 = vrot.slane %v148, %v205
        %v207 = vlaneseq
        %v208 = vshrl.u32 %v207, 7
        %v209 = vsub.s32 6, %v208
        %v210 = vrot.slane %v148, %v209
        %v211 = vlaneseq
        %v212 = vshrl.u32 %v211, 7
        %v213 = vsub.s32 7, %v212
        %v214 = vrot.slane %v148, %v213
        %v215 = vlaneseq
        %v216 = vshrl.u32 %v215, 7
        %v217 = vsub.s32 0, %v216
        %v218 = vrot.slane %v149, %v217
        %v219 = vlaneseq
        %v220 = vshrl.u32 %v219, 7
        %v221 = vsub.s32 1, %v220
        %v222 = vrot.slane %v149, %v221
        %v223 = vlaneseq
        %v224 = vshrl.u32 %v223, 7
        %v225 = vsub.s32 2, %v224
        %v226 = vrot.slane %v149, %v225
        %v227 = vlaneseq
        %v228 = vshrl.u32 %v227, 7
        %v229 = vsub.s32 3, %v228
        %v230 = vrot.slane %v149, %v229
        %v231 = vlaneseq
        %v232 = vshrl.u32 %v231, 7
        %v233 = vsub.s32 4, %v232
        %v234 = vrot.slane %v149, %v233
        %v235 = vlaneseq
        %v236 = vshrl.u32 %v235, 7
        %v237 = vsub.s32 5, %v236
        %v238 = vrot.slane %v149, %v237
        %v239 = vlaneseq
        %v240 = vshrl.u32 %v239, 7
        %v241 = vsub.s32 6, %v240
        %v242 = vrot.slane %v149, %v241
        %v243 = vlaneseq
        %v244 = vshrl.u32 %v243, 7
        %v245 = vsub.s32 7, %v244
        %v246 = vrot.slane %v149, %v245
        %v247 = vlaneseq
        %v248 = vshrl.u32 %v247, 7
        %v249 = vsub.s32 0, %v248
        %v250 = vrot.slane %v150, %v249
        %v251 = vlaneseq
        %v252 = vshrl.u32 %v251, 7
        %v253 = vsub.s32 1, %v252
        %v254 = vrot.slane %v150, %v253
        %v273 = vsub.f32 %v186, %v173
        %v274 = vsub.f32 %v190, %v173
        %v275 = vsub.f32 %v194, %v173
        %v276 = vsub.f32 %v198, %v173
        %v277 = vsub.f32 %v202, %v173
        %v278 = vsub.f32 %v206, %v173
        %v279 = vsub.f32 %v210, %v173
        %v280 = vsub.f32 %v214, %v173
        %v281 = vsub.f32 %v218, %v173
        %v282 = vsub.f32 %v222, %v173
        %v283 = vsub.f32 %v226, %v173
        %v284 = vsub.f32 %v230, %v173
        %v285 = vsub.f32 %v234, %v173
        %v286 = vsub.f32 %v238, %v173
        %v287 = vsub.f32 %v242, %v173
        %v288 = vsub.f32 %v246, %v173
        %v289 = vsub.f32 %v250, %v173
        %v290 = vsub.f32 %v254, %v173
        %v291 = vsub.f32 %v186, %v174
        %v292 = vsub.f32 %v190, %v174
        %v293 = vsub.f32 %v194, %v174
        %v294 = vsub.f32 %v198, %v174
        %v295 = vsub.f32 %v202, %v174
        %v296 = vsub.f32 %v206, %v174
        %v297 = vsub.f32 %v210, %v174
        %v298 = vsub.f32 %v214, %v174
        %v299 = vsub.f32 %v218, %v174
        %v300 = vsub.f32 %v222, %v174
        %v301 = vsub.f32 %v226, %v174
        %v302 = vsub.f32 %v230, %v174
        %v303 = vsub.f32 %v234, %v174
        %v304 = vsub.f32 %v238, %v174
        %v305 = vsub.f32 %v242, %v174
        %v306 = vsub.f32 %v246, %v174
        %v307 = vsub.f32 %v250, %v174
        %v308 = vsub.f32 %v254, %v174
        %v309 = vsub.f32 %v186, %v175
        %v310 = vsub.f32 %v190, %v175
        %v311 = vsub.f32 %v194, %v175
        %v312 = vsub.f32 %v198, %v175
        %v313 = vsub.f32 %v202, %v175
        %v314 = vsub.f32 %v206, %v175
        %v315 = vsub.f32 %v210, %v175
        %v316 = vsub.f32 %v214, %v175
        %v317 = vsub.f32 %v218, %v175
        %v318 = vsub.f32 %v222, %v175
        %v319 = vsub.f32 %v226, %v175
        %v320 = vsub.f32 %v230, %v175
        %v321 = vsub.f32 %v234, %v175
        %v322 = vsub.f32 %v238, %v175
        %v323 = vsub.f32 %v242, %v175
        %v324 = vsub.f32 %v246, %v175
        %v325 = vsub.f32 %v250, %v175
        %v326 = vsub.f32 %v254, %v175
        %v327 = vsub.f32 %v186, %v176
        %v328 = vsub.f32 %v190, %v176
        %v329 = vsub.f32 %v194, %v176
        %v330 = vsub.f32 %v198, %v176
        %v331 = vsub.f32 %v202, %v176
        %v332 = vsub.f32 %v206, %v176
        %v333 = vsub.f32 %v210, %v176
        %v334 = vsub.f32 %v214, %v176
        %v335 = vsub.f32 %v218, %v176
        %v336 = vsub.f32 %v222, %v176
        %v337 = vsub.f32 %v226, %v176
        %v338 = vsub.f32 %v230, %v176
        %v339 = vsub.f32 %v234, %v176
        %v340 = vsub.f32 %v238, %v176
        %v341 = vsub.f32 %v242, %v176
        %v342 = vsub.f32 %v246, %v176
        %v343 = vsub.f32 %v250, %v176
        %v344 = vsub.f32 %v254, %v176
        %v345 = vsub.f32 %v186, %v177
        %v346 = vsub.f32 %v190, %v177
        %v347 = vsub.f32 %v194, %v177
        %v348 = vsub.f32 %v198, %v177
        %v349 = vsub.f32 %v202, %v177
        %v350 = vsub.f32 %v206, %v177
        %v351 = vsub.f32 %v210, %v177
        %v352 = vsub.f32 %v214, %v177
        %v353 = vsub.f32 %v218, %v177
        %v354 = vsub.f32 %v222, %v177
        %v355 = vsub.f32 %v226, %v177
        %v356 = vsub.f32 %v230, %v177
        %v357 = vsub.f32 %v234, %v177
        %v358 = vsub.f32 %v238, %v177
        %v359 = vsub.f32 %v242, %v177
        %v360 = vsub.f32 %v246, %v177
        %v361 = vsub.f32 %v250, %v177
        %v362 = vsub.f32 %v254, %v177
        %v363 = vsub.f32 %v186, %v178
        %v364 = vsub.f32 %v190, %v178
        %v365 = vsub.f32 %v194, %v178
        %v366 = vsub.f32 %v198, %v178
        %v367 = vsub.f32 %v202, %v178
        %v368 = vsub.f32 %v206, %v178
        %v369 = vsub.f32 %v210, %v178
        %v370 = vsub.f32 %v214, %v178
        %v371 = vsub.f32 %v218, %v178
        %v372 = vsub.f32 %v222, %v178
        %v373 = vsub.f32 %v226, %v178
        %v374 = vsub.f32 %v230, %v178
        %v375 = vsub.f32 %v234, %v178
        %v376 = vsub.f32 %v238, %v178
        %v377 = vsub.f32 %v242, %v178
        %v378 = vsub.f32 %v246, %v178
        %v379 = vsub.f32 %v250, %v178
        %v380 = vsub.f32 %v254, %v178
        %v381 = vsub.f32 %v186, %v179
        %v382 = vsub.f32 %v190, %v179
        %v383 = vsub.f32 %v194, %v179
        %v384 = vsub.f32 %v198, %v179
        %v385 = vsub.f32 %v202, %v179
        %v386 = vsub.f32 %v206, %v179
        %v387 = vsub.f32 %v210, %v179
        %v388 = vsub.f32 %v214, %v179
        %v389 = vsub.f32 %v218, %v179
        %v390 = vsub.f32 %v222, %v179
        %v391 = vsub.f32 %v226, %v179
        %v392 = vsub.f32 %v230, %v179
        %v393 = vsub.f32 %v234, %v179
        %v394 = vsub.f32 %v238, %v179
        %v395 = vsub.f32 %v242, %v179
        %v396 = vsub.f32 %v246, %v179
        %v397 = vsub.f32 %v250, %v179
        %v398 = vsub.f32 %v254, %v179
        %v399 = vmul.f32 %v273, -48.02
        %v400 = vmul.f32 %v274, -48.02
        %v401 = vmul.f32 %v275, -48.02
        %v402 = vmul.f32 %v276, -48.02
        %v403 = vmul.f32 %v277, -48.02
        %v404 = vmul.f32 %v278, -48.02
        %v405 = vmul.f32 %v279, -48.02
        %v406 = vmul.f32 %v280, -48.02
        %v407 = vmul.f32 %v281, -48.02
        %v408 = vmul.f32 %v282, -48.02
        %v409 = vmul.f32 %v283, -48.02
        %v410 = vmul.f32 %v284, -48.02
        %v411 = vmul.f32 %v285, -48.02
        %v412 = vmul.f32 %v286, -48.02
        %v413 = vmul.f32 %v287, -48.02
        %v414 = vmul.f32 %v288, -48.02
        %v415 = vmul.f32 %v289, -48.02
        %v416 = vmul.f32 %v290, -48.02
        %v417 = vmul.f32 %v291, -48.02
        %v418 = vmul.f32 %v292, -48.02
        %v419 = vmul.f32 %v293, -48.02
        %v420 = vmul.f32 %v294, -48.02
        %v421 = vmul.f32 %v295, -48.02
        %v422 = vmul.f32 %v296, -48.02
        %v423 = vmul.f32 %v297, -48.02
        %v424 = vmul.f32 %v298, -48.02
        %v425 = vmul.f32 %v299, -48.02
        %v426 = vmul.f32 %v300, -48.02
        %v427 = vmul.f32 %v301, -48.02
        %v428 = vmul.f32 %v302, -48.02
        %v429 = vmul.f32 %v303, -48.02
        %v430 = vmul.f32 %v304, -48.02
        %v431 = vmul.f32 %v305, -48.02
        %v432 = vmul.f32 %v306, -48.02
        %v433 = vmul.f32 %v307, -48.02
        %v434 = vmul.f32 %v308, -48.02
        %v435 = vmul.f32 %v309, -48.02
        %v436 = vmul.f32 %v310, -48.02
        %v437 = vmul.f32 %v311, -48.02
        %v438 = vmul.f32 %v312, -48.02
        %v439 = vmul.f32 %v313, -48.02
        %v440 = vmul.f32 %v314, -48.02
        %v441 = vmul.f32 %v315, -48.02
        %v442 = vmul.f32 %v316, -48.02
        %v443 = vmul.f32 %v317, -48.02
        %v444 = vmul.f32 %v318, -48.02
        %v445 = vmul.f32 %v319, -48.02
        %v446 = vmul.f32 %v320, -48.02
        %v447 = vmul.f32 %v321, -48.02
        %v448 = vmul.f32 %v322, -48.02
        %v449 = vmul.f32 %v323, -48.02
        %v450 = vmul.f32 %v324, -48.02
        %v451 = vmul.f32 %v325, -48.02
        %v452 = vmul.f32 %v326, -48.02
        %v453 = vmul.f32 %v327, -48.02
        %v454 = vmul.f32 %v328, -48.02
        %v455 = vmul.f32 %v329, -48.02
        %v456 = vmul.f32 %v330, -48.02
        %v457 = vmul.f32 %v331, -48.02
        %v458 = vmul.f32 %v332, -48.02
        %v459 = vmul.f32 %v333, -48.02
        %v460 = vmul.f32 %v334, -48.02
        %v461 = vmul.f32 %v335, -48.02
        %v462 = vmul.f32 %v336, -48.02
        %v463 = vmul.f32 %v337, -48.02
        %v464 = vmul.f32 %v338, -48.02
        %v465 = vmul.f32 %v339, -48.02
        %v466 = vmul.f32 %v340, -48.02
        %v467 = vmul.f32 %v341, -48.02
        %v468 = vmul.f32 %v342, -48.02
        %v469 = vmul.f32 %v343, -48.02
        %v470 = vmul.f32 %v344, -48.02
        %v471 = vmul.f32 %v345, -48.02
        %v472 = vmul.f32 %v346, -48.02
        %v473 = vmul.f32 %v347, -48.02
        %v474 = vmul.f32 %v348, -48.02
        %v475 = vmul.f32 %v349, -48.02
        %v476 = vmul.f32 %v350, -48.02
        %v477 = vmul.f32 %v351, -48.02
        %v478 = vmul.f32 %v352, -48.02
        %v479 = vmul.f32 %v353, -48.02
        %v480 = vmul.f32 %v354, -48.02
        %v481 = vmul.f32 %v355, -48.02
        %v482 = vmul.f32 %v356, -48.02
        %v483 = vmul.f32 %v357, -48.02
        %v484 = vmul.f32 %v358, -48.02
        %v485 = vmul.f32 %v359, -48.02
        %v486 = vmul.f32 %v360, -48.02
        %v487 = vmul.f32 %v361, -48.02
        %v488 = vmul.f32 %v362, -48.02
        %v489 = vmul.f32 %v363, -48.02
        %v490 = vmul.f32 %v364, -48.02
        %v491 = vmul.f32 %v365, -48.02
        %v492 = vmul.f32 %v366, -48.02
        %v493 = vmul.f32 %v367, -48.02
        %v494 = vmul.f32 %v368, -48.02
        %v495 = vmul.f32 %v369, -48.02
        %v496 = vmul.f32 %v370, -48.02
        %v497 = vmul.f32 %v371, -48.02
        %v498 = vmul.f32 %v372, -48.02
        %v499 = vmul.f32 %v373, -48.02
        %v500 = vmul.f32 %v374, -48.02
        %v501 = vmul.f32 %v375, -48.02
        %v502 = vmul.f32 %v376, -48.02
        %v503 = vmul.f32 %v377, -48.02
        %v504 = vmul.f32 %v378, -48.02
        %v505 = vmul.f32 %v379, -48.02
        %v506 = vmul.f32 %v380, -48.02
        %v507 = vmul.f32 %v381, -48.02
        %v508 = vmul.f32 %v382, -48.02
        %v509 = vmul.f32 %v383, -48.02
        %v510 = vmul.f32 %v384, -48.02
        %v511 = vmul.f32 %v385, -48.02
        %v512 = vmul.f32 %v386, -48.02
        %v513 = vmul.f32 %v387, -48.02
        %v514 = vmul.f32 %v388, -48.02
        %v515 = vmul.f32 %v389, -48.02
        %v516 = vmul.f32 %v390, -48.02
        %v517 = vmul.f32 %v391, -48.02
        %v518 = vmul.f32 %v392, -48.02
        %v519 = vmul.f32 %v393, -48.02
        %v520 = vmul.f32 %v394, -48.02
        %v521 = vmul.f32 %v395, -48.02
        %v522 = vmul.f32 %v396, -48.02
        %v523 = vmul.f32 %v397, -48.02
        %v524 = vmul.f32 %v398, -48.02
        %v525 = vmul.f32 %v399, %v273
        %v526 = vmul.f32 %v400, %v274
        %v527 = vmul.f32 %v401, %v275
        %v528 = vmul.f32 %v402, %v276
        %v529 = vmul.f32 %v403, %v277
        %v530 = vmul.f32 %v404, %v278
        %v531 = vmul.f32 %v405, %v279
        %v532 = vmul.f32 %v406, %v280
        %v533 = vmul.f32 %v407, %v281
        %v534 = vmul.f32 %v408, %v282
        %v535 = vmul.f32 %v409, %v283
        %v536 = vmul.f32 %v410, %v284
        %v537 = vmul.f32 %v411, %v285
        %v538 = vmul.f32 %v412, %v286
        %v539 = vmul.f32 %v413, %v287
        %v540 = vmul.f32 %v414, %v288
        %v541 = vmul.f32 %v415, %v289
        %v542 = vmul.f32 %v416, %v290
        %v543 = vmul.f32 %v417, %v291
        %v544 = vmul.f32 %v418, %v292
        %v545 = vmul.f32 %v419, %v293
        %v546 = vmul.f32 %v420, %v294
        %v547 = vmul.f32 %v421, %v295
        %v548 = vmul.f32 %v422, %v296
        %v549 = vmul.f32 %v423, %v297
        %v550 = vmul.f32 %v424, %v298
        %v551 = vmul.f32 %v425, %v299
        %v552 = vmul.f32 %v426, %v300
        %v553 = vmul.f32 %v427, %v301
        %v554 = vmul.f32 %v428, %v302
        %v555 = vmul.f32 %v429, %v303
        %v556 = vmul.f32 %v430, %v304
        %v557 = vmul.f32 %v431, %v305
        %v558 = vmul.f32 %v432, %v306
        %v559 = vmul.f32 %v433, %v307
        %v560 = vmul.f32 %v434, %v308
        %v561 = vmul.f32 %v435, %v309
        %v562 = vmul.f32 %v436, %v310
        %v563 = vmul.f32 %v437, %v311
        %v564 = vmul.f32 %v438, %v312
        %v565 = vmul.f32 %v439, %v313
        %v566 = vmul.f32 %v440, %v314
        %v567 = vmul.f32 %v441, %v315
        %v568 = vmul.f32 %v442, %v316
        %v569 = vmul.f32 %v443, %v317
        %v570 = vmul.f32 %v444, %v318
        %v571 = vmul.f32 %v445, %v319
        %v572 = vmul.f32 %v446, %v320
        %v573 = vmul.f32 %v447, %v321
        %v574 = vmul.f32 %v448, %v322
        %v575 = vmul.f32 %v449, %v323
        %v576 = vmul.f32 %v450, %v324
        %v577 = vmul.f32 %v451, %v325
        %v578 = vmul.f32 %v452, %v326
        %v579 = vmul.f32 %v453, %v327
        %v580 = vmul.f32 %v454, %v328
        %v581 = vmul.f32 %v455, %v329
        %v582 = vmul.f32 %v456, %v330
        %v583 = vmul.f32 %v457, %v331
        %v584 = vmul.f32 %v458, %v332
        %v585 = vmul.f32 %v459, %v333
        %v586 = vmul.f32 %v460, %v334
        %v587 = vmul.f32 %v461, %v335
        %v588 = vmul.f32 %v462, %v336
        %v589 = vmul.f32 %v463, %v337
        %v590 = vmul.f32 %v464, %v338
        %v591 = vmul.f32 %v465, %v339
        %v592 = vmul.f32 %v466, %v340
        %v593 = vmul.f32 %v467, %v341
        %v594 = vmul.f32 %v468, %v342
        %v595 = vmul.f32 %v469, %v343
        %v596 = vmul.f32 %v470, %v344
        %v597 = vmul.f32 %v471, %v345
        %v598 = vmul.f32 %v472, %v346
        %v599 = vmul.f32 %v473, %v347
        %v600 = vmul.f32 %v474, %v348
        %v601 = vmul.f32 %v475, %v349
        %v602 = vmul.f32 %v476, %v350
        %v603 = vmul.f32 %v477, %v351
        %v604 = vmul.f32 %v478, %v352
        %v605 = vmul.f32 %v479, %v353
        %v606 = vmul.f32 %v480, %v354
        %v607 = vmul.f32 %v481, %v355
        %v608 = vmul.f32 %v482, %v356
        %v609 = vmul.f32 %v483, %v357
        %v610 = vmul.f32 %v484, %v358
        %v611 = vmul.f32 %v485, %v359
        %v612 = vmul.f32 %v486, %v360
        %v613 = vmul.f32 %v487, %v361
        %v614 = vmul.f32 %v488, %v362
        %v615 = vmul.f32 %v489, %v363
        %v616 = vmul.f32 %v490, %v364
        %v617 = vmul.f32 %v491, %v365
        %v618 = vmul.f32 %v492, %v366
        %v619 = vmul.f32 %v493, %v367
        %v620 = vmul.f32 %v494, %v368
        %v621 = vmul.f32 %v495, %v369
        %v622 = vmul.f32 %v496, %v370
        %v623 = vmul.f32 %v497, %v371
        %v624 = vmul.f32 %v498, %v372
        %v625 = vmul.f32 %v499, %v373
        %v626 = vmul.f32 %v500, %v374
        %v627 = vmul.f32 %v501, %v375
        %v628 = vmul.f32 %v502, %v376
        %v629 = vmul.f32 %v503, %v377
        %v630 = vmul.f32 %v504, %v378
        %v631 = vmul.f32 %v505, %v379
        %v632 = vmul.f32 %v506, %v380
        %v633 = vmul.f32 %v507, %v381
        %v634 = vmul.f32 %v508, %v382
        %v635 = vmul.f32 %v509, %v383
        %v636 = vmul.f32 %v510, %v384
        %v637 = vmul.f32 %v511, %v385
        %v638 = vmul.f32 %v512, %v386
        %v639 = vmul.f32 %v513, %v387
        %v640 = vmul.f32 %v514, %v388
        %v641 = vmul.f32 %v515, %v389
        %v642 = vmul.f32 %v516, %v390
        %v643 = vmul.f32 %v517, %v391
        %v644 = vmul.f32 %v518, %v392
        %v645 = vmul.f32 %v519, %v393
        %v646 = vmul.f32 %v520, %v394
        %v647 = vmul.f32 %v521, %v395
        %v648 = vmul.f32 %v522, %v396
        %v649 = vmul.f32 %v523, %v397
        %v650 = vmul.f32 %v524, %v398
        %v651 = vmul.f32 %v525, 1.442695
        %v652 = vpow.pop %v651
        %v653 = vmul.f32 %v526, 1.442695
        %v654 = vpow.pop %v653
        %v655 = vmul.f32 %v527, 1.442695
        %v656 = vpow.pop %v655
        %v657 = vmul.f32 %v528, 1.442695
        %v658 = vpow.pop %v657
        %v659 = vmul.f32 %v529, 1.442695
        %v660 = vpow.pop %v659
        %v661 = vmul.f32 %v530, 1.442695
        %v662 = vpow.pop %v661
        %v663 = vmul.f32 %v531, 1.442695
        %v664 = vpow.pop %v663
        %v665 = vmul.f32 %v532, 1.442695
        %v666 = vpow.pop %v665
        %v667 = vmul.f32 %v533, 1.442695
        %v668 = vpow.pop %v667
        %v669 = vmul.f32 %v534, 1.442695
        %v670 = vpow.pop %v669
        %v671 = vmul.f32 %v535, 1.442695
        %v672 = vpow.pop %v671
        %v673 = vmul.f32 %v536, 1.442695
        %v674 = vpow.pop %v673
        %v675 = vmul.f32 %v537, 1.442695
        %v676 = vpow.pop %v675
        %v677 = vmul.f32 %v538, 1.442695
        %v678 = vpow.pop %v677
        %v679 = vmul.f32 %v539, 1.442695
        %v680 = vpow.pop %v679
        %v681 = vmul.f32 %v540, 1.442695
        %v682 = vpow.pop %v681
        %v683 = vmul.f32 %v541, 1.442695
        %v684 = vpow.pop %v683
        %v685 = vmul.f32 %v542, 1.442695
        %v686 = vpow.pop %v685
        %v687 = vmul.f32 %v543, 1.442695
        %v688 = vpow.pop %v687
        %v689 = vmul.f32 %v544, 1.442695
        %v690 = vpow.pop %v689
        %v691 = vmul.f32 %v545, 1.442695
        %v692 = vpow.pop %v691
        %v693 = vmul.f32 %v546, 1.442695
        %v694 = vpow.pop %v693
        %v695 = vmul.f32 %v547, 1.442695
        %v696 = vpow.pop %v695
        %v697 = vmul.f32 %v548, 1.442695
        %v698 = vpow.pop %v697
        %v699 = vmul.f32 %v549, 1.442695
        %v700 = vpow.pop %v699
        %v701 = vmul.f32 %v550, 1.442695
        %v702 = vpow.pop %v701
        %v703 = vmul.f32 %v551, 1.442695
        %v704 = vpow.pop %v703
        %v705 = vmul.f32 %v552, 1.442695
        %v706 = vpow.pop %v705
        %v707 = vmul.f32 %v553, 1.442695
        %v708 = vpow.pop %v707
        %v709 = vmul.f32 %v554, 1.442695
        %v710 = vpow.pop %v709
        %v711 = vmul.f32 %v555, 1.442695
        %v712 = vpow.pop %v711
        %v713 = vmul.f32 %v556, 1.442695
        %v714 = vpow.pop %v713
        %v715 = vmul.f32 %v557, 1.442695
        %v716 = vpow.pop %v715
        %v717 = vmul.f32 %v558, 1.442695
        %v718 = vpow.pop %v717
        %v719 = vmul.f32 %v559, 1.442695
        %v720 = vpow.pop %v719
        %v721 = vmul.f32 %v560, 1.442695
        %v722 = vpow.pop %v721
        %v723 = vmul.f32 %v561, 1.442695
        %v724 = vpow.pop %v723
        %v725 = vmul.f32 %v562, 1.442695
        %v726 = vpow.pop %v725
        %v727 = vmul.f32 %v563, 1.442695
        %v728 = vpow.pop %v727
        %v729 = vmul.f32 %v564, 1.442695
        %v730 = vpow.pop %v729
        %v731 = vmul.f32 %v565, 1.442695
        %v732 = vpow.pop %v731
        %v733 = vmul.f32 %v566, 1.442695
        %v734 = vpow.pop %v733
        %v735 = vmul.f32 %v567, 1.442695
        %v736 = vpow.pop %v735
        %v737 = vmul.f32 %v568, 1.442695
        %v738 = vpow.pop %v737
        %v739 = vmul.f32 %v569, 1.442695
        %v740 = vpow.pop %v739
        %v741 = vmul.f32 %v570, 1.442695
        %v742 = vpow.pop %v741
        %v743 = vmul.f32 %v571, 1.442695
        %v744 = vpow.pop %v743
        %v745 = vmul.f32 %v572, 1.442695
        %v746 = vpow.pop %v745
        %v747 = vmul.f32 %v573, 1.442695
        %v748 = vpow.pop %v747
        %v749 = vmul.f32 %v574, 1.442695
        %v750 = vpow.pop %v749
        %v751 = vmul.f32 %v575, 1.442695
        %v752 = vpow.pop %v751
        %v753 = vmul.f32 %v576, 1.442695
        %v754 = vpow.pop %v753
        %v755 = vmul.f32 %v577, 1.442695
        %v756 = vpow.pop %v755
        %v757 = vmul.f32 %v578, 1.442695
        %v758 = vpow.pop %v757
        %v759 = vmul.f32 %v579, 1.442695
        %v760 = vpow.pop %v759
        %v761 = vmul.f32 %v580, 1.442695
        %v762 = vpow.pop %v761
        %v763 = vmul.f32 %v581, 1.442695
        %v764 = vpow.pop %v763
        %v765 = vmul.f32 %v582, 1.442695
        %v766 = vpow.pop %v765
        %v767 = vmul.f32 %v583, 1.442695
        %v768 = vpow.pop %v767
        %v769 = vmul.f32 %v584, 1.442695
        %v770 = vpow.pop %v769
        %v771 = vmul.f32 %v585, 1.442695
        %v772 = vpow.pop %v771
        %v773 = vmul.f32 %v586, 1.442695
        %v774 = vpow.pop %v773
        %v775 = vmul.f32 %v587, 1.442695
        %v776 = vpow.pop %v775
        %v777 = vmul.f32 %v588, 1.442695
        %v778 = vpow.pop %v777
        %v779 = vmul.f32 %v589, 1.442695
        %v780 = vpow.pop %v779
        %v781 = vmul.f32 %v590, 1.442695
        %v782 = vpow.pop %v781
        %v783 = vmul.f32 %v591, 1.442695
        %v784 = vpow.pop %v783
        %v785 = vmul.f32 %v592, 1.442695
        %v786 = vpow.pop %v785
        %v787 = vmul.f32 %v593, 1.442695
        %v788 = vpow.pop %v787
        %v789 = vmul.f32 %v594, 1.442695
        %v790 = vpow.pop %v789
        %v791 = vmul.f32 %v595, 1.442695
        %v792 = vpow.pop %v791
        %v793 = vmul.f32 %v596, 1.442695
        %v794 = vpow.pop %v793
        %v795 = vmul.f32 %v597, 1.442695
        %v796 = vpow.pop %v795
        %v797 = vmul.f32 %v598, 1.442695
        %v798 = vpow.pop %v797
        %v799 = vmul.f32 %v599, 1.442695
        %v800 = vpow.pop %v799
        %v801 = vmul.f32 %v600, 1.442695
        %v802 = vpow.pop %v801
        %v803 = vmul.f32 %v601, 1.442695
        %v804 = vpow.pop %v803
        %v805 = vmul.f32 %v602, 1.442695
        %v806 = vpow.pop %v805
        %v807 = vmul.f32 %v603, 1.442695
        %v808 = vpow.pop %v807
        %v809 = vmul.f32 %v604, 1.442695
        %v810 = vpow.pop %v809
        %v811 = vmul.f32 %v605, 1.442695
        %v812 = vpow.pop %v811
        %v813 = vmul.f32 %v606, 1.442695
        %v814 = vpow.pop %v813
        %v815 = vmul.f32 %v607, 1.442695
        %v816 = vpow.pop %v815
        %v817 = vmul.f32 %v608, 1.442695
        %v818 = vpow.pop %v817
        %v819 = vmul.f32 %v609, 1.442695
        %v820 = vpow.pop %v819
        %v821 = vmul.f32 %v610, 1.442695
        %v822 = vpow.pop %v821
        %v823 = vmul.f32 %v611, 1.442695
        %v824 = vpow.pop %v823
        %v825 = vmul.f32 %v612, 1.442695
        %v826 = vpow.pop %v825
        %v827 = vmul.f32 %v613, 1.442695
        %v828 = vpow.pop %v827
        %v829 = vmul.f32 %v614, 1.442695
        %v830 = vpow.pop %v829
        %v831 = vmul.f32 %v615, 1.442695
        %v832 = vpow.pop %v831
        %v833 = vmul.f32 %v616, 1.442695
        %v834 = vpow.pop %v833
        %v835 = vmul.f32 %v617, 1.442695
        %v836 = vpow.pop %v835
        %v837 = vmul.f32 %v618, 1.442695
        %v838 = vpow.pop %v837
        %v839 = vmul.f32 %v619, 1.442695
        %v840 = vpow.pop %v839
        %v841 = vmul.f32 %v620, 1.442695
        %v842 = vpow.pop %v841
        %v843 = vmul.f32 %v621, 1.442695
        %v844 = vpow.pop %v843
        %v845 = vmul.f32 %v622, 1.442695
        %v846 = vpow.pop %v845
        %v847 = vmul.f32 %v623, 1.442695
        %v848 = vpow.pop %v847
        %v849 = vmul.f32 %v624, 1.442695
        %v850 = vpow.pop %v849
        %v851 = vmul.f32 %v625, 1.442695
        %v852 = vpow.pop %v851
        %v853 = vmul.f32 %v626, 1.442695
        %v854 = vpow.pop %v853
        %v855 = vmul.f32 %v627, 1.442695
        %v856 = vpow.pop %v855
        %v857 = vmul.f32 %v628, 1.442695
        %v858 = vpow.pop %v857
        %v859 = vmul.f32 %v629, 1.442695
        %v860 = vpow.pop %v859
        %v861 = vmul.f32 %v630, 1.442695
        %v862 = vpow.pop %v861
        %v863 = vmul.f32 %v631, 1.442695
        %v864 = vpow.pop %v863
        %v865 = vmul.f32 %v632, 1.442695
        %v866 = vpow.pop %v865
        %v867 = vmul.f32 %v633, 1.442695
        %v868 = vpow.pop %v867
        %v869 = vmul.f32 %v634, 1.442695
        %v870 = vpow.pop %v869
        %v871 = vmul.f32 %v635, 1.442695
        %v872 = vpow.pop %v871
        %v873 = vmul.f32 %v636, 1.442695
        %v874 = vpow.pop %v873
        %v875 = vmul.f32 %v637, 1.442695
        %v876 = vpow.pop %v875
        %v877 = vmul.f32 %v638, 1.442695
        %v878 = vpow.pop %v877
        %v879 = vmul.f32 %v639, 1.442695
        %v880 = vpow.pop %v879
        %v881 = vmul.f32 %v640, 1.442695
        %v882 = vpow.pop %v881
        %v883 = vmul.f32 %v641, 1.442695
        %v884 = vpow.pop %v883
        %v885 = vmul.f32 %v642, 1.442695
        %v886 = vpow.pop %v885
        %v887 = vmul.f32 %v643, 1.442695
        %v888 = vpow.pop %v887
        %v889 = vmul.f32 %v644, 1.442695
        %v890 = vpow.pop %v889
        %v891 = vmul.f32 %v645, 1.442695
        %v892 = vpow.pop %v891
        %v893 = vmul.f32 %v646, 1.442695
        %v894 = vpow.pop %v893
        %v895 = vmul.f32 %v647, 1.442695
        %v896 = vpow.pop %v895
        %v897 = vmul.f32 %v648, 1.442695
        %v898 = vpow.pop %v897
        %v899 = vmul.f32 %v649, 1.442695
        %v900 = vpow.pop %v899
        %v901 = vmul.f32 %v650, 1.442695
        %v902 = vpow.pop %v901
        %903 = vst [vmem:[%s137] sm:$0xff] %v652
        %904 = vst [vmem:[%s137 + $0x8] sm:$0xff] %v654
        %905 = vst [vmem:[%s137 + $0x10] sm:$0xff] %v656
        %906 = vst [vmem:[%s137 + $0x18] sm:$0xff] %v658
        %907 = vst [vmem:[%s137 + $0x20] sm:$0xff] %v660
        %908 = vst [vmem:[%s137 + $0x28] sm:$0xff] %v662
        %909 = vst [vmem:[%s137 + $0x30] sm:$0xff] %v664
        %910 = vst [vmem:[%s137 + $0x38] sm:$0xff] %v666
        %911 = vst [vmem:[%s137 + $0x40] sm:$0xff] %v668
        %912 = vst [vmem:[%s137 + $0x48] sm:$0xff] %v670
        %913 = vst [vmem:[%s137 + $0x50] sm:$0xff] %v672
        %914 = vst [vmem:[%s137 + $0x58] sm:$0xff] %v674
        %915 = vst [vmem:[%s137 + $0x60] sm:$0xff] %v676
        %916 = vst [vmem:[%s137 + $0x68] sm:$0xff] %v678
        %917 = vst [vmem:[%s137 + $0x70] sm:$0xff] %v680
        %918 = vst [vmem:[%s137 + $0x78] sm:$0xff] %v682
        %919 = vst [vmem:[%s137 + $0x80] sm:$0xff] %v684
        %920 = vst [vmem:[%s137 + $0x88] sm:$0xff] %v686
        %921 = vst [vmem:[%s137 + $0x90] sm:$0xff] %v688
        %922 = vst [vmem:[%s137 + $0x98] sm:$0xff] %v690
        %923 = vst [vmem:[%s137 + $0xa0] sm:$0xff] %v692
        %924 = vst [vmem:[%s137 + $0xa8] sm:$0xff] %v694
        %925 = vst [vmem:[%s137 + $0xb0] sm:$0xff] %v696
        %926 = vst [vmem:[%s137 + $0xb8] sm:$0xff] %v698
        %927 = vst [vmem:[%s137 + $0xc0] sm:$0xff] %v700
        %928 = vst [vmem:[%s137 + $0xc8] sm:$0xff] %v702
        %929 = vst [vmem:[%s137 + $0xd0] sm:$0xff] %v704
        %930 = vst [vmem:[%s137 + $0xd8] sm:$0xff] %v706
        %931 = vst [vmem:[%s137 + $0xe0] sm:$0xff] %v708
        %932 = vst [vmem:[%s137 + $0xe8] sm:$0xff] %v710
        %933 = vst [vmem:[%s137 + $0xf0] sm:$0xff] %v712
        %934 = vst [vmem:[%s137 + $0xf8] sm:$0xff] %v714
        %935 = vst [vmem:[%s137 + $0x100] sm:$0xff] %v716
        %936 = vst [vmem:[%s137 + $0x108] sm:$0xff] %v718
        %937 = vst [vmem:[%s137 + $0x110] sm:$0xff] %v720
        %938 = vst [vmem:[%s137 + $0x118] sm:$0xff] %v722
        %939 = vst [vmem:[%s137 + $0x120] sm:$0xff] %v724
        %940 = vst [vmem:[%s137 + $0x128] sm:$0xff] %v726
        %941 = vst [vmem:[%s137 + $0x130] sm:$0xff] %v728
        %942 = vst [vmem:[%s137 + $0x138] sm:$0xff] %v730
        %943 = vst [vmem:[%s137 + $0x140] sm:$0xff] %v732
        %944 = vst [vmem:[%s137 + $0x148] sm:$0xff] %v734
        %945 = vst [vmem:[%s137 + $0x150] sm:$0xff] %v736
        %946 = vst [vmem:[%s137 + $0x158] sm:$0xff] %v738
        %947 = vst [vmem:[%s137 + $0x160] sm:$0xff] %v740
        %948 = vst [vmem:[%s137 + $0x168] sm:$0xff] %v742
        %949 = vst [vmem:[%s137 + $0x170] sm:$0xff] %v744
        %950 = vst [vmem:[%s137 + $0x178] sm:$0xff] %v746
        %951 = vst [vmem:[%s137 + $0x180] sm:$0xff] %v748
        %952 = vst [vmem:[%s137 + $0x188] sm:$0xff] %v750
        %953 = vst [vmem:[%s137 + $0x190] sm:$0xff] %v752
        %954 = vst [vmem:[%s137 + $0x198] sm:$0xff] %v754
        %955 = vst [vmem:[%s137 + $0x1a0] sm:$0xff] %v756
        %956 = vst [vmem:[%s137 + $0x1a8] sm:$0xff] %v758
        %957 = vst [vmem:[%s137 + $0x1b0] sm:$0xff] %v760
        %958 = vst [vmem:[%s137 + $0x1b8] sm:$0xff] %v762
        %959 = vst [vmem:[%s137 + $0x1c0] sm:$0xff] %v764
        %960 = vst [vmem:[%s137 + $0x1c8] sm:$0xff] %v766
        %961 = vst [vmem:[%s137 + $0x1d0] sm:$0xff] %v768
        %962 = vst [vmem:[%s137 + $0x1d8] sm:$0xff] %v770
        %963 = vst [vmem:[%s137 + $0x1e0] sm:$0xff] %v772
        %964 = vst [vmem:[%s137 + $0x1e8] sm:$0xff] %v774
        %965 = vst [vmem:[%s137 + $0x1f0] sm:$0xff] %v776
        %966 = vst [vmem:[%s137 + $0x1f8] sm:$0xff] %v778
        %967 = vst [vmem:[%s137 + $0x200] sm:$0xff] %v780
        %968 = vst [vmem:[%s137 + $0x208] sm:$0xff] %v782
        %969 = vst [vmem:[%s137 + $0x210] sm:$0xff] %v784
        %970 = vst [vmem:[%s137 + $0x218] sm:$0xff] %v786
        %971 = vst [vmem:[%s137 + $0x220] sm:$0xff] %v788
        %972 = vst [vmem:[%s137 + $0x228] sm:$0xff] %v790
        %973 = vst [vmem:[%s137 + $0x230] sm:$0xff] %v792
        %974 = vst [vmem:[%s137 + $0x238] sm:$0xff] %v794
        %975 = vst [vmem:[%s137 + $0x240] sm:$0xff] %v796
        %976 = vst [vmem:[%s137 + $0x248] sm:$0xff] %v798
        %977 = vst [vmem:[%s137 + $0x250] sm:$0xff] %v800
        %978 = vst [vmem:[%s137 + $0x258] sm:$0xff] %v802
        %979 = vst [vmem:[%s137 + $0x260] sm:$0xff] %v804
        %980 = vst [vmem:[%s137 + $0x268] sm:$0xff] %v806
        %981 = vst [vmem:[%s137 + $0x270] sm:$0xff] %v808
        %982 = vst [vmem:[%s137 + $0x278] sm:$0xff] %v810
        %983 = vst [vmem:[%s137 + $0x280] sm:$0xff] %v812
        %984 = vst [vmem:[%s137 + $0x288] sm:$0xff] %v814
        %985 = vst [vmem:[%s137 + $0x290] sm:$0xff] %v816
        %986 = vst [vmem:[%s137 + $0x298] sm:$0xff] %v818
        %987 = vst [vmem:[%s137 + $0x2a0] sm:$0xff] %v820
        %988 = vst [vmem:[%s137 + $0x2a8] sm:$0xff] %v822
        %989 = vst [vmem:[%s137 + $0x2b0] sm:$0xff] %v824
        %990 = vst [vmem:[%s137 + $0x2b8] sm:$0xff] %v826
        %991 = vst [vmem:[%s137 + $0x2c0] sm:$0xff] %v828
        %992 = vst [vmem:[%s137 + $0x2c8] sm:$0xff] %v830
        %993 = vst [vmem:[%s137 + $0x2d0] sm:$0xff] %v832
        %994 = vst [vmem:[%s137 + $0x2d8] sm:$0xff] %v834
        %995 = vst [vmem:[%s137 + $0x2e0] sm:$0xff] %v836
        %996 = vst [vmem:[%s137 + $0x2e8] sm:$0xff] %v838
        %997 = vst [vmem:[%s137 + $0x2f0] sm:$0xff] %v840
        %998 = vst [vmem:[%s137 + $0x2f8] sm:$0xff] %v842
        %999 = vst [vmem:[%s137 + $0x300] sm:$0xff] %v844
        %1000 = vst [vmem:[%s137 + $0x308] sm:$0xff] %v846
        %1001 = vst [vmem:[%s137 + $0x310] sm:$0xff] %v848
        %1002 = vst [vmem:[%s137 + $0x318] sm:$0xff] %v850
        %1003 = vst [vmem:[%s137 + $0x320] sm:$0xff] %v852
        %1004 = vst [vmem:[%s137 + $0x328] sm:$0xff] %v854
        %1005 = vst [vmem:[%s137 + $0x330] sm:$0xff] %v856
        %1006 = vst [vmem:[%s137 + $0x338] sm:$0xff] %v858
        %1007 = vst [vmem:[%s137 + $0x340] sm:$0xff] %v860
        %1008 = vst [vmem:[%s137 + $0x348] sm:$0xff] %v862
        %1009 = vst [vmem:[%s137 + $0x350] sm:$0xff] %v864
        %1010 = vst [vmem:[%s137 + $0x358] sm:$0xff] %v866
        %1011 = vst [vmem:[%s137 + $0x360] sm:$0x3] %v868
        %1012 = vst [vmem:[%s137 + $0x368] sm:$0x3] %v870
        %1013 = vst [vmem:[%s137 + $0x370] sm:$0x3] %v872
        %1014 = vst [vmem:[%s137 + $0x378] sm:$0x3] %v874
        %1015 = vst [vmem:[%s137 + $0x380] sm:$0x3] %v876
        %1016 = vst [vmem:[%s137 + $0x388] sm:$0x3] %v878
        %1017 = vst [vmem:[%s137 + $0x390] sm:$0x3] %v880
        %1018 = vst [vmem:[%s137 + $0x398] sm:$0x3] %v882
        %1019 = vst [vmem:[%s137 + $0x3a0] sm:$0x3] %v884
        %1020 = vst [vmem:[%s137 + $0x3a8] sm:$0x3] %v886
        %1021 = vst [vmem:[%s137 + $0x3b0] sm:$0x3] %v888
        %1022 = vst [vmem:[%s137 + $0x3b8] sm:$0x3] %v890
        %1023 = vst [vmem:[%s137 + $0x3c0] sm:$0x3] %v892
        %1024 = vst [vmem:[%s137 + $0x3c8] sm:$0x3] %v894
        %1025 = vst [vmem:[%s137 + $0x3d0] sm:$0x3] %v896
        %1026 = vst [vmem:[%s137 + $0x3d8] sm:$0x3] %v898
        %1027 = vst [vmem:[%s137 + $0x3e0] sm:$0x3] %v900
        %1028 = vst [vmem:[%s137 + $0x3e8] sm:$0x3] %v902
        %s1029 = sand.u32 %s52, 1
        %s1030 = scalar_lea.sflag [#allocation4], %s1029
        %s1031 = sand.u32 %s52, 1
        %s1032 = smul.addr %s1031, 1008
        %s1033 = scalar_lea.vmem [#allocation5], %s1032
        // Predicated region
        $region29: #{tpu_custom_call.1} parent=23 // pred_check
          %p1034 = pneg %p62
        $region30: #{tpu_custom_call.1} parent=23 // pred_check_branch
          %1036 = sbr.rel (%p1034) target = $region32
        $region31: #{tpu_custom_call.1} parent=23 // pred_region
          %s1037 = smul.u32 18, %s18
          %s1038 = ssub.s32 71, %s1037
          %p1039 = scmp.lt.s32.totalorder %s1038, 18
          %s1040 = scalar_select %p1039, %s1038, 18
          %s1041 = smul.u32 896, %s1040
          %s1043 = ssub.s32 16128, %s1041
          %1044 = vsyncadd %s1030, %s1043
          %p1045 = scmp.ne.s32.totalorder 0, %s1041
          %s1046 = smul.addr %s1037, 128
          %s1047 = scalar_lea.hbm %s1, %s1046
          %s1048 = smul.u32 %s1040, 8
          %s1049 = smul.u32 %s1048, 7
          %s1050 = sshll.u32 %s1033, 4
          %s1051 = int_to_ptr.vmem [resolvable:$true] %s1050
          %s1052 = sshll.u32 %s1049, 4
          %1056 = dma.vmem_to_hbm [thread:$0]  (%p1045), %s1051, %s1052, %s1047, %s1030, 2304, 9088, %s1048
        $region32: #{tpu_custom_call.1} parent=23 // pred_fallthru
          _
      $region24: #{tpu_custom_call.1} parent=5 // pred_fallthru
        _
      %p1057 = scmp.le.s32.totalorder 2, %s13
      // Predicated region
      $region33: #{tpu_custom_call.1} parent=5 // pred_check
        %p1058 = pneg %p1057
      $region34: #{tpu_custom_call.1} parent=5 // pred_check_branch
        %1060 = sbr.rel (%p1058) target = $region36
      $region35: #{tpu_custom_call.1} parent=5 // pred_region
        %s1061 = ssub.s32 %s13, 2
        // Predicated region
        $region37: #{tpu_custom_call.1} parent=35 // pred_check
          %p1062 = pneg %p68
        $region38: #{tpu_custom_call.1} parent=35 // pred_check_branch
          %1064 = sbr.rel (%p1062) target = $region40
        $region39: #{tpu_custom_call.1} parent=35 // pred_region
          %s1065 = sand.u32 %s53, 1
          %s1066 = scalar_lea.sflag [#allocation4], %s1065
          %s1067 = sand.u32 %s53, 1
          %s1068 = smul.addr %s1067, 1008
          %s1069 = scalar_lea.vmem [#allocation5], %s1068
          %1070 = dma.done %s1066, 16128
        $region40: #{tpu_custom_call.1} parent=35 // pred_fallthru
          _
      $region36: #{tpu_custom_call.1} parent=5 // pred_fallthru
        _
    $region6: #{tpu_custom_call.1} parent=1 // loop_footer
      %s17 = sadd.s32 1, %s13
    $region7: #{tpu_custom_call.1} parent=1 // loop_footer_branch
      %12 = sbr.rel target = $region3
    $region8: #{tpu_custom_call.1} parent=1 // loop_exit
      _
    %1071 = vsyncpa [#allocation3], 1
    %s1072 = scalar_lea.sflag [#allocation3], 1
    %1073 = vsyncpa %s1072, 1
    %1074 = vsyncpa [#allocation4], 1
    %s1075 = scalar_lea.sflag [#allocation4], 1
    %1076 = vsyncpa %s1075, 1

</llo_original>
